<compile_context>
chip_gen: v7x
topology: tpu7x:2x2x1
jax: 0.10.0
libtpu: 0.0.40
codegen_flags: <defaults>
</compile_context>

<pallas_src>
import functools

import jax
import jax.numpy as jnp
from jax import lax
from jax.experimental import pallas as pl
from jax.experimental.pallas import tpu as pltpu

_LANE = 128
_SUBLANE = 8


def _cascade_kernel(x_ref, cb_ref, cc_ref, dist_ref, err_ref, *,
                    tile_n, sub_rows, n_valid, needs_mask):
    """One N-tile of cascade codebook classification + quantization error.

    x_ref    : (TN, Hp)     f32        embeddings tile (H zero-padded to Hp)
    cb_ref   : (L, V, Hp)   bf16/f32   all cascade codebooks (VMEM resident)
    cc_ref   : (L, V)       f32        precomputed ||codebook entry||^2
    dist_ref : (TN, V)      f32/bf16   layer-0 softmax(-distance) classification
    err_ref  : (1, 8, 128)  f32        per-tile sum over layers/rows of
                                       ||resid - q||^2 (scalar, lane-dense slab)
    """
    num_layers = cb_ref.shape[0]
    mm_dtype = cb_ref.dtype
    num_sub = tile_n // sub_rows

    def cascade(rows):
        """rows: (sub_rows, Hp) f32 -> (layer-0 distribution, per-row error)."""
        resid = rows
        err = jnp.zeros((rows.shape[0], 1), jnp.float32)
        dist = None
        for layer in range(num_layers):
            cb = cb_ref[layer]                                    # (V, Hp)
            cc = cc_ref[pl.ds(layer, 1), :]                       # (1, V) f32
            # shifted squared L2 distance: ||C||^2 - 2 r.C^T  (MXU, f32 acc).
            # The per-row ||r||^2 term is constant along V, so it cancels in
            # argmin and in the shift-stabilized softmax below.
            xc = lax.dot_general(resid.astype(mm_dtype), cb,
                                 dimension_numbers=(((1,), (1,)), ((), ())),
                                 preferred_element_type=jnp.float32)  # (S, V)
            d = cc - 2.0 * xc
            if layer == 0:
                logits = jnp.min(d, axis=-1, keepdims=True) - d   # == -d - max(-d)
                e = jnp.exp(logits)
                # exact division so rows sum to 1 exactly;
                # pl.reciprocal(approx=True) would move this onto the EUP at
                # ~1e-3 relative error if that is acceptable downstream.
                dist = e / jnp.sum(e, axis=-1, keepdims=True)
            if layer == num_layers - 1:
                # last layer: min(d) + ||r||^2 == ||r - q*||^2, so the one-hot
                # gather matmul is skipped entirely (clamp guards tiny negative
                # rounding of the distance expansion).
                rr = jnp.sum(resid * resid, axis=-1, keepdims=True)
                err = err + jnp.maximum(
                    jnp.min(d, axis=-1, keepdims=True) + rr, 0.0)
            else:
                idx = jnp.argmin(d, axis=-1)                      # (S,)
                onehot = (lax.broadcasted_iota(jnp.int32, d.shape, 1)
                          == idx[:, None]).astype(mm_dtype)       # (S, V)
                q = jnp.dot(onehot, cb,
                            preferred_element_type=jnp.float32)   # (S, Hp)
                diff = resid - q
                err = err + jnp.sum(diff * diff, axis=-1, keepdims=True)
                resid = diff
        return dist, err

    # Static unroll over independent row sub-chains: lets the scheduler issue
    # sub-tile B's distance matmul while sub-tile A is in argmin / one-hot.
    tile_err = jnp.zeros((), jnp.float32)
    for s in range(num_sub):
        rows = x_ref[pl.ds(s * sub_rows, sub_rows), :].astype(jnp.float32)
        dist, err = cascade(rows)
        dist_ref[pl.ds(s * sub_rows, sub_rows), :] = dist.astype(dist_ref.dtype)
        if needs_mask:  # only emitted when N was padded up to a tile multiple
            row = (pl.program_id(0) * tile_n + s * sub_rows
                   + lax.broadcasted_iota(jnp.int32, (sub_rows, 1), 0))
            err = jnp.where(row < n_valid, err, 0.0)
        tile_err = tile_err + jnp.sum(err)

    # one scalar per tile, written as a lane-dense slab (no masked vst.msk)
    err_ref[...] = jnp.broadcast_to(tile_err, err_ref.shape)


def _round_up(x, m):
    return -(-x // m) * m


def _default_tile_n():
    # v5e's MXU is 4x(128x128): a 256-row tile only serializes extra passes
    # while doubling live f32 state; v6e/v7x MXUs are 256 wide.
    try:
        kind = jax.devices()[0].device_kind.lower()
    except Exception:
        kind = ""
    return 128 if "v5" in kind else 256


def auto_model_internal_forward(token_ids, emb_table, codebooks,
                                commitment_cost=0.25, tile_n=None,
                                use_bf16_matmul=True,
                                distribution_dtype=jnp.float32,
                                single_buffer_codebook=True):
    """Reproduces AutoModel.internal_forward on embedded tokens.

    token_ids : (B, S) int32
    emb_table : (V, H) f32     nn.Embedding weight
    codebooks : (L, V, H) f32  cascade codebook weights
    returns (distribution (B, S, V), qloss scalar f32)
    """
    B, S = token_ids.shape
    V, H = emb_table.shape
    L = codebooks.shape[0]
    N = B * S

    # embedding lookup is glue (gather) -> plain JAX
    embeds = jnp.take(emb_table, token_ids.reshape(-1), axis=0)       # (N, H)

    # pad hidden dim to a lane-dense multiple of 128 (zeros are inert for L2)
    Hp = max(_LANE, _round_up(H, _LANE))
    if Hp != H:
        embeds = jnp.pad(embeds, ((0, 0), (0, Hp - H)))
        cbs = jnp.pad(codebooks, ((0, 0), (0, 0), (0, Hp - H)))
    else:
        cbs = codebooks

    # row tile: generation default, clamped so tiny N is only padded to the
    # sublane multiple (8), not to a full tile
    if tile_n is None:
        tile_n = _default_tile_n()
    tile_n = max(_SUBLANE, min(tile_n, _round_up(N, _SUBLANE)))
    n_pad = _round_up(N, tile_n)
    if n_pad != N:
        embeds = jnp.pad(embeds, ((0, n_pad - N), (0, 0)))
    num_tiles = n_pad // tile_n
    # two independent 128-row sub-chains per tile when the tile allows it
    sub_rows = 128 if (tile_n > 128 and tile_n % 128 == 0) else tile_n

    mm_dtype = jnp.bfloat16 if use_bf16_matmul else jnp.float32
    cb_in = cbs.astype(mm_dtype)
    # ||C||^2 is grid-invariant -> precompute once, from the matmul-precision
    # codebook so the distance expansion is self-consistent.
    cc = jnp.sum(jnp.square(cb_in.astype(jnp.float32)), axis=-1)      # (L, V)

    kernel = functools.partial(_cascade_kernel, tile_n=tile_n,
                               sub_rows=sub_rows, n_valid=N,
                               needs_mask=(n_pad != N))

    def run(codebook_buffers):
        # VMEM budget from the actual block sizes (+50% & 2 MiB headroom,
        # 16 MiB floor) instead of requesting an entire v7x core's 64 MiB.
        mm_bytes = jnp.dtype(mm_dtype).itemsize
        dist_bytes = jnp.dtype(distribution_dtype).itemsize
        vmem_need = (2 * tile_n * Hp * 4                      # x, double-buffered
                     + 2 * tile_n * V * dist_bytes            # dist out
                     + codebook_buffers * L * V * (Hp * mm_bytes + 4)
                     + 2 * _SUBLANE * _LANE * 4)              # err out
        vmem_limit = max(int(1.5 * vmem_need) + (2 << 20), 16 << 20)

        if codebook_buffers == 1:
            # grid-invariant operands: fetched once, kept single-buffered
            cb_spec = pl.BlockSpec((L, V, Hp), lambda i: (0, 0, 0),
                                   pipeline_mode=pl.Buffered(1))
            cc_spec = pl.BlockSpec((L, V), lambda i: (0, 0),
                                   pipeline_mode=pl.Buffered(1))
        else:
            cb_spec = pl.BlockSpec((L, V, Hp), lambda i: (0, 0, 0))
            cc_spec = pl.BlockSpec((L, V), lambda i: (0, 0))

        return pl.pallas_call(
            kernel,
            out_shape=(
                jax.ShapeDtypeStruct((n_pad, V), distribution_dtype),
                jax.ShapeDtypeStruct((num_tiles, _SUBLANE, _LANE), jnp.float32),
            ),
            grid_spec=pltpu.PrefetchScalarGridSpec(
                num_scalar_prefetch=0,
                grid=(num_tiles,),
                in_specs=[
                    pl.BlockSpec((tile_n, Hp), lambda i: (i, 0)),
                    cb_spec,
                    cc_spec,
                ],
                out_specs=[
                    pl.BlockSpec((tile_n, V), lambda i: (i, 0)),
                    pl.BlockSpec((1, _SUBLANE, _LANE), lambda i: (i, 0, 0)),
                ],
            ),
            compiler_params=pltpu.CompilerParams(
                dimension_semantics=("parallel",),
                vmem_limit_bytes=vmem_limit,
            ),
        )(embeds, cb_in, cc)

    # TODO(synk): for production vocab sizes (V ~ 32K) add a V-tiled grid axis
    # with a running (min, argmin) carry instead of keeping (L, V, Hp) and the
    # (tile_n, V) distance block fully VMEM-resident.
    dist = err = None
    if single_buffer_codebook:
        try:
            dist, err = run(1)
        except Exception:
            # this JAX build rejects pipeline_mode=pl.Buffered(1); fall back
            # to default double buffering (correct, just more VMEM).
            dist = err = None
    if dist is None:
        dist, err = run(2)

    # forward value of codebook_loss + commitment_cost*commitment_loss
    # collapses to (1 + commitment_cost) * mean(||resid - q||^2) per layer,
    # summed over layers; the mean is over the ORIGINAL N*H elements
    # (padding contributes 0 via masking / inert zeros).
    qloss = (1.0 + commitment_cost) * jnp.sum(err[:, 0, 0]) / (N * H)
    distribution = dist[:N].reshape(B, S, V)
    return distribution, qloss


def _reference_internal_forward(token_ids, emb_table, codebooks,
                                commitment_cost=0.25):
    """Pure-JAX f32 reference for AutoModel.internal_forward."""
    B, S = token_ids.shape
    V = emb_table.shape[0]
    x = jnp.take(emb_table, token_ids.reshape(-1), axis=0)            # (N, H)
    resid = x
    qloss = jnp.float32(0.0)
    distribution = None
    for layer in range(codebooks.shape[0]):
        cb = codebooks[layer]                                          # (V, H)
        d = jnp.sum(jnp.square(resid[:, None, :] - cb[None, :, :]), axis=-1)
        if layer == 0:
            distribution = jax.nn.softmax(-d, axis=-1)
        q = cb[jnp.argmin(d, axis=-1)]
        qloss = qloss + (1.0 + commitment_cost) * jnp.mean(jnp.square(resid - q))
        resid = resid - q
    return distribution.reshape(B, S, V), qloss


if __name__ == "__main__":
    # small, deterministic setup
    vocab_size = 128
    hidden_size = 32
    batch, seq = 2, 8
    codebook_layers = 2
    commitment_cost = 0.25

    key = jax.random.PRNGKey(0)
    k_emb, k_cb, k_ids, k_ids2 = jax.random.split(key, 4)

    emb_table = jax.random.normal(k_emb, (vocab_size, hidden_size),
                                  dtype=jnp.float32) * 0.1
    codebooks = jax.random.normal(
        k_cb, (codebook_layers, vocab_size, hidden_size),
        dtype=jnp.float32) * 0.1
    token_ids = jax.random.randint(k_ids, (batch, seq), 0, vocab_size,
                                   dtype=jnp.int32)

    # default (bf16-MXU) path at the module's small shapes
    distribution, qloss = auto_model_internal_forward(
        token_ids, emb_table, codebooks, commitment_cost=commitment_cost)
    jax.block_until_ready((distribution, qloss))

    assert distribution.shape == (batch, seq, vocab_size)
    assert qloss.shape == ()
    assert bool(jnp.isfinite(qloss)) and float(qloss) >= 0.0
    # distribution rows are softmaxes -> sum to 1 (exact division in-kernel)
    assert jnp.allclose(jnp.sum(distribution, axis=-1), 1.0, atol=1e-5)

    # bit-careful f32 path vs pure-JAX reference; this larger case also
    # exercises N padding/masking and the 2x128 sub-chain split (tile_n=256).
    ids_big = jax.random.randint(k_ids2, (4, 70), 0, vocab_size,
                                 dtype=jnp.int32)
    dist_k, loss_k = auto_model_internal_forward(
        ids_big, emb_table, codebooks, commitment_cost=commitment_cost,
        tile_n=256, use_bf16_matmul=False)
    dist_r, loss_r = _reference_internal_forward(
        ids_big, emb_table, codebooks, commitment_cost=commitment_cost)
    jax.block_until_ready((dist_k, loss_k))
    assert jnp.allclose(dist_k, dist_r, atol=1e-4), \
        float(jnp.max(jnp.abs(dist_k - dist_r)))
    assert jnp.allclose(loss_k, loss_r, rtol=1e-3, atol=1e-5), \
        (float(loss_k), float(loss_r))

    # TODO(synk): AutoModel.forward / generate_data raise NotImplementedError
    # in the reference; only internal_forward has defined semantics.
    print("KERNEL_OK")
</pallas_src>

<mosaic_0001>
module attributes {stable_mosaic.version = 11 : i64} {
  func.func @_cascade_kernel(%arg0: i32, %arg1: memref<16x128xf32, #tpu.memory_space<vmem>>, %arg2: memref<2x128x128xbf16, #tpu.memory_space<vmem>>, %arg3: memref<2x128xf32, #tpu.memory_space<vmem>>, %arg4: memref<16x128xf32, #tpu.memory_space<vmem>>, %arg5: memref<1x8x128xf32, #tpu.memory_space<vmem>>) attributes {dimension_semantics = [#tpu.dimension_semantics<parallel>], iteration_bounds = array<i64: 1>, scalar_prefetch = 0 : i64, scratch_operands = 0 : i64, tpu.core_type = #tpu.core_type<tc>, window_params = [{transform_indices = @transform_0, window_bounds = array<i64: 16, 128>}, {pipeline_mode = #tpu.pipeline_mode<synchronous>, transform_indices = @transform_1, window_bounds = array<i64: 2, 128, 128>}, {pipeline_mode = #tpu.pipeline_mode<synchronous>, transform_indices = @transform_2, window_bounds = array<i64: 2, 128>}, {transform_indices = @transform_3, window_bounds = array<i64: 16, 128>}, {transform_indices = @transform_4, window_bounds = array<i64: 1, 8, 128>}]} {
    %c0 = arith.constant 0 : index
    %c0_0 = arith.constant 0 : index
    %0 = vector.load %arg1[%c0, %c0_0] : memref<16x128xf32, #tpu.memory_space<vmem>>, vector<16x128xf32>
    %cst = arith.constant 0.000000e+00 : f32
    %1 = vector.broadcast %cst : f32 to vector<16x1xf32>
    %c0_1 = arith.constant 0 : index
    %c0_2 = arith.constant 0 : index
    %c0_3 = arith.constant 0 : index
    %2 = vector.load %arg2[%c0_1, %c0_2, %c0_3] : memref<2x128x128xbf16, #tpu.memory_space<vmem>>, vector<1x128x128xbf16>
    %3 = vector.shape_cast %2 : vector<1x128x128xbf16> to vector<128x128xbf16>
    %c0_4 = arith.constant 0 : index
    %c0_5 = arith.constant 0 : index
    %4 = vector.load %arg3[%c0_4, %c0_5] : memref<2x128xf32, #tpu.memory_space<vmem>>, vector<1x128xf32>
    %5 = arith.truncf %0 : vector<16x128xf32> to vector<16x128xbf16>
    %cst_6 = arith.constant dense<0.000000e+00> : vector<16x128xf32>
    %6 = tpu.matmul %5, %3, %cst_6 {dimension_numbers = #tpu.dot_dimension_numbers<[1], [1], [0], [0], [0, 0, 1, 0], [], []>} : vector<16x128xbf16>, vector<128x128xbf16>, vector<16x128xf32> -> vector<16x128xf32>
    %cst_7 = arith.constant 2.000000e+00 : f32
    %7 = vector.broadcast %cst_7 : f32 to vector<16x128xf32>
    %8 = arith.mulf %7, %6 : vector<16x128xf32>
    %9 = vector.broadcast %4 : vector<1x128xf32> to vector<16x128xf32>
    %10 = arith.subf %9, %8 : vector<16x128xf32>
    %cst_8 = arith.constant dense<0x7F800000> : vector<16xf32>
    %11 = vector.multi_reduction <minimumf>, %10, %cst_8 [1] : vector<16x128xf32> to vector<16xf32>
    %12 = vector.shape_cast %11 : vector<16xf32> to vector<16x1xf32>
    %13 = vector.broadcast %12 : vector<16x1xf32> to vector<16x128xf32>
    %14 = arith.subf %13, %10 : vector<16x128xf32>
    %15 = math.exp %14 : vector<16x128xf32>
    %cst_9 = arith.constant dense<0.000000e+00> : vector<16xf32>
    %16 = vector.multi_reduction <add>, %15, %cst_9 [1] : vector<16x128xf32> to vector<16xf32>
    %17 = vector.shape_cast %16 : vector<16xf32> to vector<16x1xf32>
    %18 = vector.broadcast %17 : vector<16x1xf32> to vector<16x128xf32>
    %19 = arith.divf %15, %18 : vector<16x128xf32>
    %20 = tpu.reduce_index %10 {axis = 1 : i32, kind = #tpu.reduction_kind<arg_min>} : vector<16x128xf32> -> vector<16xi32>
    %21 = tpu.iota {dimensions = array<i32: 1>} : vector<16x128xi32>
    %22 = vector.shape_cast %20 : vector<16xi32> to vector<16x1xi32>
    %23 = vector.broadcast %22 : vector<16x1xi32> to vector<16x128xi32>
    %24 = arith.cmpi eq, %21, %23 : vector<16x128xi32>
    %25 = arith.extui %24 : vector<16x128xi1> to vector<16x128xi32>
    %26 = arith.sitofp %25 : vector<16x128xi32> to vector<16x128xf32>
    %27 = arith.truncf %26 : vector<16x128xf32> to vector<16x128xbf16>
    %cst_10 = arith.constant dense<0.000000e+00> : vector<16x128xf32>
    %28 = tpu.matmul %27, %3, %cst_10 {dimension_numbers = #tpu.dot_dimension_numbers<[1], [0], [0], [1], [0, 0, 1, 1], [], []>} : vector<16x128xbf16>, vector<128x128xbf16>, vector<16x128xf32> -> vector<16x128xf32>
    %29 = arith.subf %0, %28 : vector<16x128xf32>
    %30 = arith.mulf %29, %29 : vector<16x128xf32>
    %cst_11 = arith.constant dense<0.000000e+00> : vector<16xf32>
    %31 = vector.multi_reduction <add>, %30, %cst_11 [1] : vector<16x128xf32> to vector<16xf32>
    %32 = vector.shape_cast %31 : vector<16xf32> to vector<16x1xf32>
    %33 = arith.addf %1, %32 : vector<16x1xf32>
    %c1 = arith.constant 1 : index
    %c0_12 = arith.constant 0 : index
    %c0_13 = arith.constant 0 : index
    %34 = vector.load %arg2[%c1, %c0_12, %c0_13] : memref<2x128x128xbf16, #tpu.memory_space<vmem>>, vector<1x128x128xbf16>
    %35 = vector.shape_cast %34 : vector<1x128x128xbf16> to vector<128x128xbf16>
    %c1_14 = arith.constant 1 : index
    %c0_15 = arith.constant 0 : index
    %36 = vector.load %arg3[%c1_14, %c0_15] : memref<2x128xf32, #tpu.memory_space<vmem>>, vector<1x128xf32>
    %37 = arith.truncf %29 : vector<16x128xf32> to vector<16x128xbf16>
    %cst_16 = arith.constant dense<0.000000e+00> : vector<16x128xf32>
    %38 = tpu.matmul %37, %35, %cst_16 {dimension_numbers = #tpu.dot_dimension_numbers<[1], [1], [0], [0], [0, 0, 1, 0], [], []>} : vector<16x128xbf16>, vector<128x128xbf16>, vector<16x128xf32> -> vector<16x128xf32>
    %cst_17 = arith.constant 2.000000e+00 : f32
    %39 = vector.broadcast %cst_17 : f32 to vector<16x128xf32>
    %40 = arith.mulf %39, %38 : vector<16x128xf32>
    %41 = vector.broadcast %36 : vector<1x128xf32> to vector<16x128xf32>
    %42 = arith.subf %41, %40 : vector<16x128xf32>
    %43 = arith.mulf %29, %29 : vector<16x128xf32>
    %cst_18 = arith.constant dense<0.000000e+00> : vector<16xf32>
    %44 = vector.multi_reduction <add>, %43, %cst_18 [1] : vector<16x128xf32> to vector<16xf32>
    %45 = vector.shape_cast %44 : vector<16xf32> to vector<16x1xf32>
    %cst_19 = arith.constant dense<0x7F800000> : vector<16xf32>
    %46 = vector.multi_reduction <minimumf>, %42, %cst_19 [1] : vector<16x128xf32> to vector<16xf32>
    %47 = vector.shape_cast %46 : vector<16xf32> to vector<16x1xf32>
    %48 = arith.addf %47, %45 : vector<16x1xf32>
    %cst_20 = arith.constant 0.000000e+00 : f32
    %49 = vector.broadcast %cst_20 : f32 to vector<16x1xf32>
    %50 = arith.maximumf %48, %49 : vector<16x1xf32>
    %51 = arith.addf %33, %50 : vector<16x1xf32>
    %c0_21 = arith.constant 0 : index
    %c0_22 = arith.constant 0 : index
    %52 = vector.load %arg4[%c0_21, %c0_22] : memref<16x128xf32, #tpu.memory_space<vmem>>, vector<16x128xf32>
    tpu.vector_store %arg4[%c0_21, %c0_22], %19 {strides = array<i32>} : memref<16x128xf32, #tpu.memory_space<vmem>>, vector<16x128xf32>,
    %53 = vector.shape_cast %51 : vector<16x1xf32> to vector<1x16x1xf32>
    %cst_23 = arith.constant dense<0.000000e+00> : vector<1xf32>
    %54 = vector.multi_reduction <add>, %53, %cst_23 [1, 2] : vector<1x16x1xf32> to vector<1xf32>
    %55 = vector.shape_cast %54 : vector<1xf32> to vector<1x1x1xf32>
    %56 = vector.extract %55[0, 0, 0] : f32 from vector<1x1x1xf32>
    %cst_24 = arith.constant 0.000000e+00 : f32
    %57 = arith.addf %cst_24, %56 : f32
    %58 = vector.broadcast %57 : f32 to vector<1x8x128xf32>
    %c0_25 = arith.constant 0 : index
    %c0_26 = arith.constant 0 : index
    %c0_27 = arith.constant 0 : index
    %59 = vector.load %arg5[%c0_25, %c0_26, %c0_27] : memref<1x8x128xf32, #tpu.memory_space<vmem>>, vector<1x8x128xf32>
    tpu.vector_store %arg5[%c0_25, %c0_26, %c0_27], %58 {strides = array<i32>} : memref<1x8x128xf32, #tpu.memory_space<vmem>>, vector<1x8x128xf32>,
    return
  }
  func.func @transform_0(%arg0: i32) -> (i32, i32) {
    %c0_i32 = arith.constant 0 : i32
    %c0_i32_0 = arith.constant 0 : i32
    return %arg0, %c0_i32 : i32, i32
  }
  func.func @transform_1(%arg0: i32) -> (i32, i32, i32) {
    %c0_i32 = arith.constant 0 : i32
    %c0_i32_0 = arith.constant 0 : i32
    %c0_i32_1 = arith.constant 0 : i32
    %c0_i32_2 = arith.constant 0 : i32
    return %c0_i32, %c0_i32_0, %c0_i32_1 : i32, i32, i32
  }
  func.func @transform_2(%arg0: i32) -> (i32, i32) {
    %c0_i32 = arith.constant 0 : i32
    %c0_i32_0 = arith.constant 0 : i32
    %c0_i32_1 = arith.constant 0 : i32
    return %c0_i32, %c0_i32_0 : i32, i32
  }
  func.func @transform_3(%arg0: i32) -> (i32, i32) {
    %c0_i32 = arith.constant 0 : i32
    %c0_i32_0 = arith.constant 0 : i32
    return %arg0, %c0_i32 : i32, i32
  }
  func.func @transform_4(%arg0: i32) -> (i32, i32, i32) {
    %c0_i32 = arith.constant 0 : i32
    %c0_i32_0 = arith.constant 0 : i32
    %c0_i32_1 = arith.constant 0 : i32
    return %arg0, %c0_i32, %c0_i32_0 : i32, i32, i32
  }
}

module attributes {stable_mosaic.version = 11 : i64} {
  func.func @_cascade_kernel(%arg0: i32, %arg1: memref<16x128xf32, #tpu.memory_space<vmem>>, %arg2: memref<2x128x128xbf16, #tpu.memory_space<vmem>>, %arg3: memref<2x128xf32, #tpu.memory_space<vmem>>, %arg4: memref<16x128xf32, #tpu.memory_space<vmem>>, %arg5: memref<1x8x128xf32, #tpu.memory_space<vmem>>) attributes {dimension_semantics = [#tpu.dimension_semantics<parallel>], iteration_bounds = array<i64: 1>, scalar_prefetch = 0 : i64, scratch_operands = 0 : i64, tpu.core_type = #tpu.core_type<tc>, window_params = [{transform_indices = @transform_0, window_bounds = array<i64: 16, 128>}, {pipeline_mode = #tpu.pipeline_mode<synchronous>, transform_indices = @transform_1, window_bounds = array<i64: 2, 128, 128>}, {pipeline_mode = #tpu.pipeline_mode<synchronous>, transform_indices = @transform_2, window_bounds = array<i64: 2, 128>}, {transform_indices = @transform_3, window_bounds = array<i64: 16, 128>}, {transform_indices = @transform_4, window_bounds = array<i64: 1, 8, 128>}]} {
    %c0 = arith.constant 0 : index
    %c0_0 = arith.constant 0 : index
    %0 = vector.load %arg1[%c0, %c0_0] : memref<16x128xf32, #tpu.memory_space<vmem>>, vector<16x128xf32>
    %cst = arith.constant 0.000000e+00 : f32
    %1 = vector.broadcast %cst : f32 to vector<16x1xf32>
    %c0_1 = arith.constant 0 : index
    %c0_2 = arith.constant 0 : index
    %c0_3 = arith.constant 0 : index
    %2 = vector.load %arg2[%c0_1, %c0_2, %c0_3] : memref<2x128x128xbf16, #tpu.memory_space<vmem>>, vector<1x128x128xbf16>
    %3 = vector.shape_cast %2 : vector<1x128x128xbf16> to vector<128x128xbf16>
    %c0_4 = arith.constant 0 : index
    %c0_5 = arith.constant 0 : index
    %4 = vector.load %arg3[%c0_4, %c0_5] : memref<2x128xf32, #tpu.memory_space<vmem>>, vector<1x128xf32>
    %5 = arith.truncf %0 : vector<16x128xf32> to vector<16x128xbf16>
    %cst_6 = arith.constant dense<0.000000e+00> : vector<16x128xf32>
    %6 = tpu.matmul %5, %3, %cst_6 {dimension_numbers = #tpu.dot_dimension_numbers<[1], [1], [0], [0], [0, 0, 1, 0], [], []>} : vector<16x128xbf16>, vector<128x128xbf16>, vector<16x128xf32> -> vector<16x128xf32>
    %cst_7 = arith.constant 2.000000e+00 : f32
    %7 = vector.broadcast %cst_7 : f32 to vector<16x128xf32>
    %8 = arith.mulf %7, %6 : vector<16x128xf32>
    %9 = vector.broadcast %4 : vector<1x128xf32> to vector<16x128xf32>
    %10 = arith.subf %9, %8 : vector<16x128xf32>
    %cst_8 = arith.constant dense<0x7F800000> : vector<16xf32>
    %11 = vector.multi_reduction <minimumf>, %10, %cst_8 [1] : vector<16x128xf32> to vector<16xf32>
    %12 = vector.shape_cast %11 : vector<16xf32> to vector<16x1xf32>
    %13 = vector.broadcast %12 : vector<16x1xf32> to vector<16x128xf32>
    %14 = arith.subf %13, %10 : vector<16x128xf32>
    %15 = math.exp %14 : vector<16x128xf32>
    %cst_9 = arith.constant dense<0.000000e+00> : vector<16xf32>
    %16 = vector.multi_reduction <add>, %15, %cst_9 [1] : vector<16x128xf32> to vector<16xf32>
    %17 = vector.shape_cast %16 : vector<16xf32> to vector<16x1xf32>
    %18 = vector.broadcast %17 : vector<16x1xf32> to vector<16x128xf32>
    %19 = arith.divf %15, %18 : vector<16x128xf32>
    %20 = tpu.reduce_index %10 {axis = 1 : i32, kind = #tpu.reduction_kind<arg_min>} : vector<16x128xf32> -> vector<16xi32>
    %21 = tpu.iota {dimensions = array<i32: 1>} : vector<16x128xi32>
    %22 = vector.shape_cast %20 : vector<16xi32> to vector<16x1xi32>
    %23 = vector.broadcast %22 : vector<16x1xi32> to vector<16x128xi32>
    %24 = arith.cmpi eq, %21, %23 : vector<16x128xi32>
    %25 = arith.extui %24 : vector<16x128xi1> to vector<16x128xi32>
    %26 = arith.sitofp %25 : vector<16x128xi32> to vector<16x128xf32>
    %27 = arith.truncf %26 : vector<16x128xf32> to vector<16x128xbf16>
    %cst_10 = arith.constant dense<0.000000e+00> : vector<16x128xf32>
    %28 = tpu.matmul %27, %3, %cst_10 {dimension_numbers = #tpu.dot_dimension_numbers<[1], [0], [0], [1], [0, 0, 1, 1], [], []>} : vector<16x128xbf16>, vector<128x128xbf16>, vector<16x128xf32> -> vector<16x128xf32>
    %29 = arith.subf %0, %28 : vector<16x128xf32>
    %30 = arith.mulf %29, %29 : vector<16x128xf32>
    %cst_11 = arith.constant dense<0.000000e+00> : vector<16xf32>
    %31 = vector.multi_reduction <add>, %30, %cst_11 [1] : vector<16x128xf32> to vector<16xf32>
    %32 = vector.shape_cast %31 : vector<16xf32> to vector<16x1xf32>
    %33 = arith.addf %1, %32 : vector<16x1xf32>
    %c1 = arith.constant 1 : index
    %c0_12 = arith.constant 0 : index
    %c0_13 = arith.constant 0 : index
    %34 = vector.load %arg2[%c1, %c0_12, %c0_13] : memref<2x128x128xbf16, #tpu.memory_space<vmem>>, vector<1x128x128xbf16>
    %35 = vector.shape_cast %34 : vector<1x128x128xbf16> to vector<128x128xbf16>
    %c1_14 = arith.constant 1 : index
    %c0_15 = arith.constant 0 : index
    %36 = vector.load %arg3[%c1_14, %c0_15] : memref<2x128xf32, #tpu.memory_space<vmem>>, vector<1x128xf32>
    %37 = arith.truncf %29 : vector<16x128xf32> to vector<16x128xbf16>
    %cst_16 = arith.constant dense<0.000000e+00> : vector<16x128xf32>
    %38 = tpu.matmul %37, %35, %cst_16 {dimension_numbers = #tpu.dot_dimension_numbers<[1], [1], [0], [0], [0, 0, 1, 0], [], []>} : vector<16x128xbf16>, vector<128x128xbf16>, vector<16x128xf32> -> vector<16x128xf32>
    %cst_17 = arith.constant 2.000000e+00 : f32
    %39 = vector.broadcast %cst_17 : f32 to vector<16x128xf32>
    %40 = arith.mulf %39, %38 : vector<16x128xf32>
    %41 = vector.broadcast %36 : vector<1x128xf32> to vector<16x128xf32>
    %42 = arith.subf %41, %40 : vector<16x128xf32>
    %43 = arith.mulf %29, %29 : vector<16x128xf32>
    %cst_18 = arith.constant dense<0.000000e+00> : vector<16xf32>
    %44 = vector.multi_reduction <add>, %43, %cst_18 [1] : vector<16x128xf32> to vector<16xf32>
    %45 = vector.shape_cast %44 : vector<16xf32> to vector<16x1xf32>
    %cst_19 = arith.constant dense<0x7F800000> : vector<16xf32>
    %46 = vector.multi_reduction <minimumf>, %42, %cst_19 [1] : vector<16x128xf32> to vector<16xf32>
    %47 = vector.shape_cast %46 : vector<16xf32> to vector<16x1xf32>
    %48 = arith.addf %47, %45 : vector<16x1xf32>
    %cst_20 = arith.constant 0.000000e+00 : f32
    %49 = vector.broadcast %cst_20 : f32 to vector<16x1xf32>
    %50 = arith.maximumf %48, %49 : vector<16x1xf32>
    %51 = arith.addf %33, %50 : vector<16x1xf32>
    %c0_21 = arith.constant 0 : index
    %c0_22 = arith.constant 0 : index
    %52 = vector.load %arg4[%c0_21, %c0_22] : memref<16x128xf32, #tpu.memory_space<vmem>>, vector<16x128xf32>
    tpu.vector_store %arg4[%c0_21, %c0_22], %19 {strides = array<i32>} : memref<16x128xf32, #tpu.memory_space<vmem>>, vector<16x128xf32>,
    %53 = vector.shape_cast %51 : vector<16x1xf32> to vector<1x16x1xf32>
    %cst_23 = arith.constant dense<0.000000e+00> : vector<1xf32>
    %54 = vector.multi_reduction <add>, %53, %cst_23 [1, 2] : vector<1x16x1xf32> to vector<1xf32>
    %55 = vector.shape_cast %54 : vector<1xf32> to vector<1x1x1xf32>
    %56 = vector.extract %55[0, 0, 0] : f32 from vector<1x1x1xf32>
    %cst_24 = arith.constant 0.000000e+00 : f32
    %57 = arith.addf %cst_24, %56 : f32
    %58 = vector.broadcast %57 : f32 to vector<1x8x128xf32>
    %c0_25 = arith.constant 0 : index
    %c0_26 = arith.constant 0 : index
    %c0_27 = arith.constant 0 : index
    %59 = vector.load %arg5[%c0_25, %c0_26, %c0_27] : memref<1x8x128xf32, #tpu.memory_space<vmem>>, vector<1x8x128xf32>
    tpu.vector_store %arg5[%c0_25, %c0_26, %c0_27], %58 {strides = array<i32>} : memref<1x8x128xf32, #tpu.memory_space<vmem>>, vector<1x8x128xf32>,
    return
  }
  func.func @transform_0(%arg0: i32) -> (i32, i32) {
    %c0_i32 = arith.constant 0 : i32
    %c0_i32_0 = arith.constant 0 : i32
    return %arg0, %c0_i32 : i32, i32
  }
  func.func @transform_1(%arg0: i32) -> (i32, i32, i32) {
    %c0_i32 = arith.constant 0 : i32
    %c0_i32_0 = arith.constant 0 : i32
    %c0_i32_1 = arith.constant 0 : i32
    %c0_i32_2 = arith.constant 0 : i32
    return %c0_i32, %c0_i32_0, %c0_i32_1 : i32, i32, i32
  }
  func.func @transform_2(%arg0: i32) -> (i32, i32) {
    %c0_i32 = arith.constant 0 : i32
    %c0_i32_0 = arith.constant 0 : i32
    %c0_i32_1 = arith.constant 0 : i32
    return %c0_i32, %c0_i32_0 : i32, i32
  }
  func.func @transform_3(%arg0: i32) -> (i32, i32) {
    %c0_i32 = arith.constant 0 : i32
    %c0_i32_0 = arith.constant 0 : i32
    return %arg0, %c0_i32 : i32, i32
  }
  func.func @transform_4(%arg0: i32) -> (i32, i32, i32) {
    %c0_i32 = arith.constant 0 : i32
    %c0_i32_0 = arith.constant 0 : i32
    %c0_i32_1 = arith.constant 0 : i32
    return %arg0, %c0_i32, %c0_i32_0 : i32, i32, i32
  }
}

</mosaic_0001>

<llo_original>
// kernel: tpu_custom_call.1
$region0: #{tpu_custom_call.1}
  #allocation0 [shape = 'u32[]', space=smem, size = 0x4, offset = 0x4, fixed_abs, tag = 'smem constant byte address 0x4 - core index']
  #allocation1 [shape = 'u32[144,128]{1,0:T(1,128)}', space=vmem, size = 0x12000, scoped, tag = 'internal scratch']
  %s0 = inlined_call_operand.hbm [shape: f32[16,128], index: 0, kind: input, shape index: {}]
  %s1 = inlined_call_operand.hbm [shape: bf16[2,128,128], index: 1, kind: input, shape index: {}]
  %s2 = inlined_call_operand.vmem [shape: f32[2,128], index: 2, kind: input, shape index: {}]
  %s3 = inlined_call_operand.hbm [shape: f32[16,128], index: 3, kind: output, shape index: {0}]
  %s4 = inlined_call_operand.hbm [shape: f32[1,8,128], index: 4, kind: output, shape index: {1}]
  %5 = xla_tuple %s3, %s4
  %s6 = sld [smem:[#allocation0]]
  $region38: #{tpu_custom_call.1} parent=0
    _
  %s8 = ssub.s32 1, %s6
  %s9 = scalar_select 0, %s8, %s6
  $region1: #{tpu_custom_call.1} parent=0
    #allocation2 [shape = 'u8[8192]{0}', space=vmem, size = 0x2000, scoped, tag = 'input window, operand 0, single buffered']
    #allocation3 [shape = 's32[1]{0}', space=sflag, size = 0x4, scoped, tag = 'scoped memory for tpu_custom_call.1']
    #allocation4 [shape = 's32[1]{0}', space=sflag, size = 0x4, scoped, tag = 'scoped memory for tpu_custom_call.1']
    #allocation5 [shape = 'u8[65536]{0}', space=vmem, size = 0x10000, scoped, tag = 'input window, operand 1, single buffered']
    #allocation6 [shape = 's32[1]{0}', space=sflag, size = 0x4, scoped, tag = 'scoped memory for tpu_custom_call.1']
    #allocation7 [shape = 'u8[8192]{0}', space=vmem, size = 0x2000, scoped, tag = 'output window, operand 0, single buffered']
    #allocation8 [shape = 'u8[4096]{0}', space=vmem, size = 0x1000, scoped, tag = 'output window, operand 1, single buffered']
    #allocation9 [shape = 's32[1]{0}', space=sflag, size = 0x4, scoped, tag = 'scoped memory for tpu_custom_call.1']
    %10 = vsyncpa [#allocation3], 0
    %11 = vsyncpa [#allocation6], 0
    %12 = vsyncpa [#allocation4], 0
    %13 = vsyncpa [#allocation9], 0
    // Predicated region
    $region2: #{tpu_custom_call.1} parent=1 // pred_check
      _
    $region3: #{tpu_custom_call.1} parent=1 // pred_check_branch
      %15 = sbr.rel (0) target = $region5
    $region4: #{tpu_custom_call.1} parent=1 // pred_region
      %s17 = ssub.s32 256, 256
      %18 = vsyncadd [#allocation3], %s17
      %s19 = sshll.u32 [#allocation2], 4
      %s20 = int_to_ptr.vmem [resolvable:$true] %s19
      %25 = dma.hbm_to_vmem [thread:$0]  %s0, 256, %s20, [#allocation3], 128, 128, 8
    $region5: #{tpu_custom_call.1} parent=1 // pred_fallthru
      _
    // Predicated region
    $region6: #{tpu_custom_call.1} parent=1 // pred_check
      _
    $region7: #{tpu_custom_call.1} parent=1 // pred_check_branch
      %27 = sbr.rel (0) target = $region9
    $region8: #{tpu_custom_call.1} parent=1 // pred_region
      %s29 = ssub.s32 2048, 2048
      %30 = vsyncadd [#allocation6], %s29
      %s31 = sshll.u32 [#allocation5], 4
      %s32 = int_to_ptr.vmem [resolvable:$true] %s31
      %37 = dma.hbm_to_vmem [thread:$0]  %s1, 2048, %s32, [#allocation6], 64, 64, 4
    $region9: #{tpu_custom_call.1} parent=1 // pred_fallthru
      _
    // Predicated region
    $region10: #{tpu_custom_call.1} parent=1 // pred_check
      _
    $region11: #{tpu_custom_call.1} parent=1 // pred_check_branch
      %39 = sbr.rel (0) target = $region13
    $region12: #{tpu_custom_call.1} parent=1 // pred_region
      _
    $region13: #{tpu_custom_call.1} parent=1 // pred_fallthru
      _
    // Predicated region
    $region14: #{tpu_custom_call.1} parent=1 // pred_check
      _
    $region15: #{tpu_custom_call.1} parent=1 // pred_check_branch
      %41 = sbr.rel (0) target = $region17
    $region16: #{tpu_custom_call.1} parent=1 // pred_region
      %42 = dma.done [#allocation3], 256
    $region17: #{tpu_custom_call.1} parent=1 // pred_fallthru
      _
    // Predicated region
    $region18: #{tpu_custom_call.1} parent=1 // pred_check
      _
    $region19: #{tpu_custom_call.1} parent=1 // pred_check_branch
      %44 = sbr.rel (0) target = $region21
    $region20: #{tpu_custom_call.1} parent=1 // pred_region
      %45 = dma.done [#allocation6], 2048
    $region21: #{tpu_custom_call.1} parent=1 // pred_fallthru
      _
    %v47 = vld [vmem:[#allocation2] sm:$0xff]
    %v48 = vld [vmem:[#allocation2 + $0x8] sm:$0xff]
    %v49 = vld [vmem:[#allocation5] sm:$0xf]
    %v50 = vld [vmem:[#allocation5 + $0x4] sm:$0xf]
    %v51 = vld [vmem:[#allocation5 + $0x8] sm:$0xf]
    %v52 = vld [vmem:[#allocation5 + $0xc] sm:$0xf]
    %v53 = vld [vmem:[#allocation5 + $0x10] sm:$0xf]
    %v54 = vld [vmem:[#allocation5 + $0x14] sm:$0xf]
    %v55 = vld [vmem:[#allocation5 + $0x18] sm:$0xf]
    %v56 = vld [vmem:[#allocation5 + $0x1c] sm:$0xf]
    %v57 = vld [vmem:[#allocation5 + $0x20] sm:$0xf]
    %v58 = vld [vmem:[#allocation5 + $0x24] sm:$0xf]
    %v59 = vld [vmem:[#allocation5 + $0x28] sm:$0xf]
    %v60 = vld [vmem:[#allocation5 + $0x2c] sm:$0xf]
    %v61 = vld [vmem:[#allocation5 + $0x30] sm:$0xf]
    %v62 = vld [vmem:[#allocation5 + $0x34] sm:$0xf]
    %v63 = vld [vmem:[#allocation5 + $0x38] sm:$0xf]
    %v64 = vld [vmem:[#allocation5 + $0x3c] sm:$0xf]
    %v65 = vld [vmem:[%s2] sm:$0x1]
    %v66 = vpack.c.bf16 %v48, %v47
    %v83 = vunpack.c.l.b16 %v49
    %v84 = vunpack.c.l.b16 %v50
    %v85 = vunpack.c.l.b16 %v51
    %v86 = vunpack.c.l.b16 %v52
    %v87 = vunpack.c.l.b16 %v53
    %v88 = vunpack.c.l.b16 %v54
    %v89 = vunpack.c.l.b16 %v55
    %v90 = vunpack.c.l.b16 %v56
    %v91 = vunpack.c.l.b16 %v57
    %v92 = vunpack.c.l.b16 %v58
    %v93 = vunpack.c.l.b16 %v59
    %v94 = vunpack.c.l.b16 %v60
    %v95 = vunpack.c.l.b16 %v61
    %v96 = vunpack.c.l.b16 %v62
    %v97 = vunpack.c.l.b16 %v63
    %v98 = vunpack.c.l.b16 %v64
    %v99 = vpack.c.b16 %v84, %v83
    %v100 = vpack.c.b16 %v86, %v85
    %v101 = vpack.c.b16 %v88, %v87
    %v102 = vpack.c.b16 %v90, %v89
    %v103 = vpack.c.b16 %v92, %v91
    %v104 = vpack.c.b16 %v94, %v93
    %v105 = vpack.c.b16 %v96, %v95
    %v106 = vpack.c.b16 %v98, %v97
    %115 = vmatprep.subr.bf16.mxu0 0
    %116 = vmatpush1.bf16.xpose.msra.mxu0 %v99
    %117 = vmatprep.subr.bf16.mxu0 0
    %118 = vmatpush1.bf16.xpose.msra.mxu0 %v100
    %119 = vmatprep.subr.bf16.mxu0 0
    %120 = vmatpush1.bf16.xpose.msra.mxu0 %v101
    %121 = vmatprep.subr.bf16.mxu0 0
    %122 = vmatpush1.bf16.xpose.msra.mxu0 %v102
    %123 = vmatprep.subr.bf16.mxu0 0
    %124 = vmatpush1.bf16.xpose.msra.mxu0 %v103
    %125 = vmatprep.subr.bf16.mxu0 0
    %126 = vmatpush1.bf16.xpose.msra.mxu0 %v104
    %127 = vmatprep.subr.bf16.mxu0 0
    %128 = vmatpush1.bf16.xpose.msra.mxu0 %v105
    %129 = vmatprep.subr.bf16.mxu0 0
    %130 = vmatpush1.bf16.xpose.msra.mxu0 %v106
    %131 = vmatprep.subr.bf16.mxu0 0
    %132 = vmatpush1.bf16.xpose.msra.mxu0 0
    %133 = vmatprep.subr.bf16.mxu0 0
    %134 = vmatpush1.bf16.xpose.msra.mxu0 0
    %135 = vmatprep.subr.bf16.mxu0 0
    %136 = vmatpush1.bf16.xpose.msra.mxu0 0
    %137 = vmatprep.subr.bf16.mxu0 0
    %138 = vmatpush1.bf16.xpose.msra.mxu0 0
    %139 = vmatprep.subr.bf16.mxu0 0
    %140 = vmatpush1.bf16.xpose.msra.mxu0 0
    %141 = vmatprep.subr.bf16.mxu0 0
    %142 = vmatpush1.bf16.xpose.msra.mxu0 0
    %143 = vmatprep.subr.bf16.mxu0 0
    %144 = vmatpush1.bf16.xpose.msra.mxu0 0
    %145 = vmatprep.subr.bf16.mxu0 0
    %146 = vmatpush1.bf16.xpose.msra.mxu0 0
    %147 = vmatprep.mubr.bf16.mxu0 0
    %148 = vmatmul.mubr.bf16.gmra.mrb[0].mxu0 %v66
    %v149 = vpop.f32.mrb[0].mxu0
    %v150 = vadd.f32 0.0, %v149
    %v151 = vpop.f32.mrb[0].mxu0
    %v152 = vpop.f32.mrb[0].mxu0
    %v153 = vadd.f32 0.0, %v152
    %v154 = vpop.f32.mrb[0].mxu0
    %155 = vdwg.mxu0
    %v156 = vmul.f32 %v150, 2.0
    %v157 = vmul.f32 %v153, 2.0
    %v158 = vlaneseq
    %v159 = vshrl.u32 %v158, 7
    %v160 = vsub.s32 0, %v159
    %v161 = vrot.slane %v65, %v160
    %v162 = vsub.f32 %v161, %v156
    %v163 = vsub.f32 %v161, %v157
    %164 = vmin.xlane.f32.xlu0 %v162
    %v165 = vpop.xlane.xlu0 %164
    %166 = vmin.xlane.f32.xlu0 %v163
    %v167 = vpop.xlane.xlu0 %166
    %v168 = vsub.f32 %v165, %v162
    %v169 = vsub.f32 %v167, %v163
    %v170 = vmul.f32 %v168, 1.442695
    %v171 = vpow.pop %v170
    %v172 = vmul.f32 %v169, 1.442695
    %v173 = vpow.pop %v172
    %174 = vadd.xlane.f32.xlu0 %v171
    %v175 = vpop.xlane.xlu0 %174
    %176 = vadd.xlane.f32.xlu0 %v173
    %v177 = vpop.xlane.xlu0 %176
    %v178 = vrcp.pop %v175
    %v179 = vmul.f32 %v171, %v178
    %v180 = vrcp.pop %v177
    %v181 = vmul.f32 %v173, %v180
    %182 = vmin.index.xlane.f32.xlu0 %v162
    %v183 = vpop.xlane.xlu0 %182
    %184 = vmin.index.xlane.f32.xlu0 %v163
    %v185 = vpop.xlane.xlu0 %184
    %v186 = vlaneseq
    %v187 = vand.u32 %v186, 127
    %vm188 = vcmp.eq.s32.totalorder %v187, %v183
    %vm189 = vcmp.eq.s32.totalorder %v187, %v185
    %v190 = vsel %vm188, 1, 0
    %v191 = vsel %vm189, 1, 0
    %v192 = vcvt.s32.f32 %v190
    %v193 = vcvt.s32.f32 %v191
    %v194 = vpack.c.bf16 %v193, %v192
    %195 = vmatprep.subr.bf16.mxu0 0
    %196 = vmatpush1.bf16.msra.mxu0 %v99
    %197 = vmatprep.subr.bf16.mxu0 0
    %198 = vmatpush1.bf16.msra.mxu0 %v100
    %199 = vmatprep.subr.bf16.mxu0 0
    %200 = vmatpush1.bf16.msra.mxu0 %v101
    %201 = vmatprep.subr.bf16.mxu0 0
    %202 = vmatpush1.bf16.msra.mxu0 %v102
    %203 = vmatprep.subr.bf16.mxu0 0
    %204 = vmatpush1.bf16.msra.mxu0 %v103
    %205 = vmatprep.subr.bf16.mxu0 0
    %206 = vmatpush1.bf16.msra.mxu0 %v104
    %207 = vmatprep.subr.bf16.mxu0 0
    %208 = vmatpush1.bf16.msra.mxu0 %v105
    %209 = vmatprep.subr.bf16.mxu0 0
    %210 = vmatpush1.bf16.msra.mxu0 %v106
    %211 = vmatprep.subr.bf16.mxu0 0
    %212 = vmatpush1.bf16.msra.mxu0 0
    %213 = vmatprep.subr.bf16.mxu0 0
    %214 = vmatpush1.bf16.msra.mxu0 0
    %215 = vmatprep.subr.bf16.mxu0 0
    %216 = vmatpush1.bf16.msra.mxu0 0
    %217 = vmatprep.subr.bf16.mxu0 0
    %218 = vmatpush1.bf16.msra.mxu0 0
    %219 = vmatprep.subr.bf16.mxu0 0
    %220 = vmatpush1.bf16.msra.mxu0 0
    %221 = vmatprep.subr.bf16.mxu0 0
    %222 = vmatpush1.bf16.msra.mxu0 0
    %223 = vmatprep.subr.bf16.mxu0 0
    %224 = vmatpush1.bf16.msra.mxu0 0
    %225 = vmatprep.subr.bf16.mxu0 0
    %226 = vmatpush1.bf16.msra.mxu0 0
    %227 = vmatprep.mubr.bf16.mxu0 0
    %228 = vmatmul.mubr.bf16.gmra.mrb[0].mxu0 %v194
    %v229 = vpop.f32.mrb[0].mxu0
    %v230 = vadd.f32 0.0, %v229
    %v231 = vpop.f32.mrb[0].mxu0
    %v232 = vpop.f32.mrb[0].mxu0
    %v233 = vadd.f32 0.0, %v232
    %v234 = vpop.f32.mrb[0].mxu0
    %235 = vdwg.mxu0
    %v236 = vsub.f32 %v47, %v230
    %v237 = vsub.f32 %v48, %v233
    %v238 = vmul.f32 %v236, %v236
    %v239 = vmul.f32 %v237, %v237
    %240 = vadd.xlane.f32.xlu0 %v238
    %v241 = vpop.xlane.xlu0 %240
    %242 = vadd.xlane.f32.xlu0 %v239
    %v243 = vpop.xlane.xlu0 %242
    %v244 = vadd.f32 %v241, 0.0
    %v245 = vadd.f32 %v243, 0.0
    %s246 = scalar_lea.vmem [#allocation5], 64
    %v247 = vld [vmem:[%s246] sm:$0xf]
    %v248 = vld [vmem:[%s246 + $0x4] sm:$0xf]
    %v249 = vld [vmem:[%s246 + $0x8] sm:$0xf]
    %v250 = vld [vmem:[%s246 + $0xc] sm:$0xf]
    %v251 = vld [vmem:[%s246 + $0x10] sm:$0xf]
    %v252 = vld [vmem:[%s246 + $0x14] sm:$0xf]
    %v253 = vld [vmem:[%s246 + $0x18] sm:$0xf]
    %v254 = vld [vmem:[%s246 + $0x1c] sm:$0xf]
    %v255 = vld [vmem:[%s246 + $0x20] sm:$0xf]
    %v256 = vld [vmem:[%s246 + $0x24] sm:$0xf]
    %v257 = vld [vmem:[%s246 + $0x28] sm:$0xf]
    %v258 = vld [vmem:[%s246 + $0x2c] sm:$0xf]
    %v259 = vld [vmem:[%s246 + $0x30] sm:$0xf]
    %v260 = vld [vmem:[%s246 + $0x34] sm:$0xf]
    %v261 = vld [vmem:[%s246 + $0x38] sm:$0xf]
    %v262 = vld [vmem:[%s246 + $0x3c] sm:$0xf]
    %v263 = vld [vmem:[%s2 + $0x1] sm:$0x1]
    %v264 = vpack.c.bf16 %v237, %v236
    %v281 = vunpack.c.l.b16 %v247
    %v282 = vunpack.c.l.b16 %v248
    %v283 = vunpack.c.l.b16 %v249
    %v284 = vunpack.c.l.b16 %v250
    %v285 = vunpack.c.l.b16 %v251
    %v286 = vunpack.c.l.b16 %v252
    %v287 = vunpack.c.l.b16 %v253
    %v288 = vunpack.c.l.b16 %v254
    %v289 = vunpack.c.l.b16 %v255
    %v290 = vunpack.c.l.b16 %v256
    %v291 = vunpack.c.l.b16 %v257
    %v292 = vunpack.c.l.b16 %v258
    %v293 = vunpack.c.l.b16 %v259
    %v294 = vunpack.c.l.b16 %v260
    %v295 = vunpack.c.l.b16 %v261
    %v296 = vunpack.c.l.b16 %v262
    %v297 = vpack.c.b16 %v282, %v281
    %v298 = vpack.c.b16 %v284, %v283
    %v299 = vpack.c.b16 %v286, %v285
    %v300 = vpack.c.b16 %v288, %v287
    %v301 = vpack.c.b16 %v290, %v289
    %v302 = vpack.c.b16 %v292, %v291
    %v303 = vpack.c.b16 %v294, %v293
    %v304 = vpack.c.b16 %v296, %v295
    %313 = vmatprep.subr.bf16.mxu0 0
    %314 = vmatpush1.bf16.xpose.msra.mxu0 %v297
    %315 = vmatprep.subr.bf16.mxu0 0
    %316 = vmatpush1.bf16.xpose.msra.mxu0 %v298
    %317 = vmatprep.subr.bf16.mxu0 0
    %318 = vmatpush1.bf16.xpose.msra.mxu0 %v299
    %319 = vmatprep.subr.bf16.mxu0 0
    %320 = vmatpush1.bf16.xpose.msra.mxu0 %v300
    %321 = vmatprep.subr.bf16.mxu0 0
    %322 = vmatpush1.bf16.xpose.msra.mxu0 %v301
    %323 = vmatprep.subr.bf16.mxu0 0
    %324 = vmatpush1.bf16.xpose.msra.mxu0 %v302
    %325 = vmatprep.subr.bf16.mxu0 0
    %326 = vmatpush1.bf16.xpose.msra.mxu0 %v303
    %327 = vmatprep.subr.bf16.mxu0 0
    %328 = vmatpush1.bf16.xpose.msra.mxu0 %v304
    %329 = vmatprep.subr.bf16.mxu0 0
    %330 = vmatpush1.bf16.xpose.msra.mxu0 0
    %331 = vmatprep.subr.bf16.mxu0 0
    %332 = vmatpush1.bf16.xpose.msra.mxu0 0
    %333 = vmatprep.subr.bf16.mxu0 0
    %334 = vmatpush1.bf16.xpose.msra.mxu0 0
    %335 = vmatprep.subr.bf16.mxu0 0
    %336 = vmatpush1.bf16.xpose.msra.mxu0 0
    %337 = vmatprep.subr.bf16.mxu0 0
    %338 = vmatpush1.bf16.xpose.msra.mxu0 0
    %339 = vmatprep.subr.bf16.mxu0 0
    %340 = vmatpush1.bf16.xpose.msra.mxu0 0
    %341 = vmatprep.subr.bf16.mxu0 0
    %342 = vmatpush1.bf16.xpose.msra.mxu0 0
    %343 = vmatprep.subr.bf16.mxu0 0
    %344 = vmatpush1.bf16.xpose.msra.mxu0 0
    %345 = vmatprep.mubr.bf16.mxu0 0
    %346 = vmatmul.mubr.bf16.gmra.mrb[0].mxu0 %v264
    %v347 = vpop.f32.mrb[0].mxu0
    %v348 = vadd.f32 0.0, %v347
    %v349 = vpop.f32.mrb[0].mxu0
    %v350 = vpop.f32.mrb[0].mxu0
    %v351 = vadd.f32 0.0, %v350
    %v352 = vpop.f32.mrb[0].mxu0
    %353 = vdwg.mxu0
    %v354 = vmul.f32 %v348, 2.0
    %v355 = vmul.f32 %v351, 2.0
    %v356 = vlaneseq
    %v357 = vshrl.u32 %v356, 7
    %v358 = vsub.s32 0, %v357
    %v359 = vrot.slane %v263, %v358
    %v360 = vsub.f32 %v359, %v354
    %v361 = vsub.f32 %v359, %v355
    %362 = vmin.xlane.f32.xlu0 %v360
    %v363 = vpop.xlane.xlu0 %362
    %364 = vmin.xlane.f32.xlu0 %v361
    %v365 = vpop.xlane.xlu0 %364
    %v366 = vadd.f32 %v363, %v241
    %v367 = vadd.f32 %v365, %v243
    %v368 = vmax.f32 %v366, 0.0
    %v369 = vmax.f32 %v367, 0.0
    %v370 = vadd.f32 %v244, %v368
    %v371 = vadd.f32 %v245, %v369
    %372 = vst [vmem:[#allocation7] sm:$0xff] %v179
    %373 = vst [vmem:[#allocation7 + $0x8] sm:$0xff] %v181
    %vm374 = vcmask 7168
    %v375 = vsel %vm374, %v370, 0.0
    %v376 = vsel %vm374, %v371, 0.0
    %v377 = vadd.f32 %v375, %v376
    %378 = vadd.xlane.f32.xlu0 %v377
    %v379 = vpop.xlane.xlu0 %378
    %v380 = vrot.slane %v379, 4
    %v381 = vadd.f32 %v379, %v380
    %v382 = vrot.slane %v381, 2
    %v383 = vadd.f32 %v381, %v382
    %v384 = vrot.slane %v383, 1
    %v385 = vadd.f32 %v383, %v384
    %s386 = vtos %v385
    %s387 = sadd.f32 %s386, 0.0
    %v388 = vstv %s387
    %389 = vst [vmem:[#allocation8] sm:$0xff] %v388
    // Predicated region
    $region22: #{tpu_custom_call.1} parent=1 // pred_check
      _
    $region23: #{tpu_custom_call.1} parent=1 // pred_check_branch
      %391 = sbr.rel (0) target = $region25
    $region24: #{tpu_custom_call.1} parent=1 // pred_region
      %s393 = ssub.s32 256, 256
      %394 = vsyncadd [#allocation4], %s393
      %s395 = sshll.u32 [#allocation7], 4
      %s396 = int_to_ptr.vmem [resolvable:$true] %s395
      %401 = dma.vmem_to_hbm [thread:$0]  %s396, 256, %s3, [#allocation4], 128, 128, 8
    $region25: #{tpu_custom_call.1} parent=1 // pred_fallthru
      _
    // Predicated region
    $region26: #{tpu_custom_call.1} parent=1 // pred_check
      _
    $region27: #{tpu_custom_call.1} parent=1 // pred_check_branch
      %403 = sbr.rel (0) target = $region29
    $region28: #{tpu_custom_call.1} parent=1 // pred_region
      %s405 = ssub.s32 128, 128
      %406 = vsyncadd [#allocation9], %s405
      %s408 = sshll.u32 [#allocation8], 4
      %s409 = int_to_ptr.vmem [resolvable:$true] %s408
      %411 = dma.vmem_to_hbm [thread:$0]  %s409, 128, %s4, [#allocation9]
    $region29: #{tpu_custom_call.1} parent=1 // pred_fallthru
      _
    // Predicated region
    $region30: #{tpu_custom_call.1} parent=1 // pred_check
      _
    $region31: #{tpu_custom_call.1} parent=1 // pred_check_branch
      %413 = sbr.rel (0) target = $region33
    $region32: #{tpu_custom_call.1} parent=1 // pred_region
      %414 = dma.done [#allocation4], 256
    $region33: #{tpu_custom_call.1} parent=1 // pred_fallthru
      _
    // Predicated region
    $region34: #{tpu_custom_call.1} parent=1 // pred_check
      _
    $region35: #{tpu_custom_call.1} parent=1 // pred_check_branch
      %416 = sbr.rel (0) target = $region37
    $region36: #{tpu_custom_call.1} parent=1 // pred_region
      %417 = dma.done [#allocation9], 128
    $region37: #{tpu_custom_call.1} parent=1 // pred_fallthru
      _
    %418 = vsyncpa [#allocation3], 1
    %419 = vsyncpa [#allocation6], 1
    %420 = vsyncpa [#allocation4], 1
    %421 = vsyncpa [#allocation9], 1

// kernel: tpu_custom_call.1
$region0: #{tpu_custom_call.1}
  #allocation0 [shape = 'u32[]', space=smem, size = 0x4, offset = 0x4, fixed_abs, tag = 'smem constant byte address 0x4 - core index']
  #allocation1 [shape = 'u32[144,128]{1,0:T(1,128)}', space=vmem, size = 0x12000, scoped, tag = 'internal scratch']
  %s0 = inlined_call_operand.hbm [shape: f32[16,128], index: 0, kind: input, shape index: {}]
  %s1 = inlined_call_operand.hbm [shape: bf16[2,128,128], index: 1, kind: input, shape index: {}]
  %s2 = inlined_call_operand.vmem [shape: f32[2,128], index: 2, kind: input, shape index: {}]
  %s3 = inlined_call_operand.hbm [shape: f32[16,128], index: 3, kind: output, shape index: {0}]
  %s4 = inlined_call_operand.hbm [shape: f32[1,8,128], index: 4, kind: output, shape index: {1}]
  %5 = xla_tuple %s3, %s4
  %s6 = sld [smem:[#allocation0]]
  $region38: #{tpu_custom_call.1} parent=0
    _
  %s8 = ssub.s32 1, %s6
  %s9 = scalar_select 0, %s8, %s6
  $region1: #{tpu_custom_call.1} parent=0
    #allocation2 [shape = 'u8[8192]{0}', space=vmem, size = 0x2000, scoped, tag = 'input window, operand 0, single buffered']
    #allocation3 [shape = 's32[1]{0}', space=sflag, size = 0x4, scoped, tag = 'scoped memory for tpu_custom_call.1']
    #allocation4 [shape = 's32[1]{0}', space=sflag, size = 0x4, scoped, tag = 'scoped memory for tpu_custom_call.1']
    #allocation5 [shape = 'u8[65536]{0}', space=vmem, size = 0x10000, scoped, tag = 'input window, operand 1, single buffered']
    #allocation6 [shape = 's32[1]{0}', space=sflag, size = 0x4, scoped, tag = 'scoped memory for tpu_custom_call.1']
    #allocation7 [shape = 'u8[8192]{0}', space=vmem, size = 0x2000, scoped, tag = 'output window, operand 0, single buffered']
    #allocation8 [shape = 'u8[4096]{0}', space=vmem, size = 0x1000, scoped, tag = 'output window, operand 1, single buffered']
    #allocation9 [shape = 's32[1]{0}', space=sflag, size = 0x4, scoped, tag = 'scoped memory for tpu_custom_call.1']
    %10 = vsyncpa [#allocation3], 0
    %11 = vsyncpa [#allocation6], 0
    %12 = vsyncpa [#allocation4], 0
    %13 = vsyncpa [#allocation9], 0
    // Predicated region
    $region2: #{tpu_custom_call.1} parent=1 // pred_check
      _
    $region3: #{tpu_custom_call.1} parent=1 // pred_check_branch
      %15 = sbr.rel (0) target = $region5
    $region4: #{tpu_custom_call.1} parent=1 // pred_region
      %s17 = ssub.s32 256, 256
      %18 = vsyncadd [#allocation3], %s17
      %s19 = sshll.u32 [#allocation2], 4
      %s20 = int_to_ptr.vmem [resolvable:$true] %s19
      %25 = dma.hbm_to_vmem [thread:$0]  %s0, 256, %s20, [#allocation3], 128, 128, 8
    $region5: #{tpu_custom_call.1} parent=1 // pred_fallthru
      _
    // Predicated region
    $region6: #{tpu_custom_call.1} parent=1 // pred_check
      _
    $region7: #{tpu_custom_call.1} parent=1 // pred_check_branch
      %27 = sbr.rel (0) target = $region9
    $region8: #{tpu_custom_call.1} parent=1 // pred_region
      %s29 = ssub.s32 2048, 2048
      %30 = vsyncadd [#allocation6], %s29
      %s31 = sshll.u32 [#allocation5], 4
      %s32 = int_to_ptr.vmem [resolvable:$true] %s31
      %37 = dma.hbm_to_vmem [thread:$0]  %s1, 2048, %s32, [#allocation6], 64, 64, 4
    $region9: #{tpu_custom_call.1} parent=1 // pred_fallthru
      _
    // Predicated region
    $region10: #{tpu_custom_call.1} parent=1 // pred_check
      _
    $region11: #{tpu_custom_call.1} parent=1 // pred_check_branch
      %39 = sbr.rel (0) target = $region13
    $region12: #{tpu_custom_call.1} parent=1 // pred_region
      _
    $region13: #{tpu_custom_call.1} parent=1 // pred_fallthru
      _
    // Predicated region
    $region14: #{tpu_custom_call.1} parent=1 // pred_check
      _
    $region15: #{tpu_custom_call.1} parent=1 // pred_check_branch
      %41 = sbr.rel (0) target = $region17
    $region16: #{tpu_custom_call.1} parent=1 // pred_region
      %42 = dma.done [#allocation3], 256
    $region17: #{tpu_custom_call.1} parent=1 // pred_fallthru
      _
    // Predicated region
    $region18: #{tpu_custom_call.1} parent=1 // pred_check
      _
    $region19: #{tpu_custom_call.1} parent=1 // pred_check_branch
      %44 = sbr.rel (0) target = $region21
    $region20: #{tpu_custom_call.1} parent=1 // pred_region
      %45 = dma.done [#allocation6], 2048
    $region21: #{tpu_custom_call.1} parent=1 // pred_fallthru
      _
    %v47 = vld [vmem:[#allocation2] sm:$0xff]
    %v48 = vld [vmem:[#allocation2 + $0x8] sm:$0xff]
    %v49 = vld [vmem:[#allocation5] sm:$0xf]
    %v50 = vld [vmem:[#allocation5 + $0x4] sm:$0xf]
    %v51 = vld [vmem:[#allocation5 + $0x8] sm:$0xf]
    %v52 = vld [vmem:[#allocation5 + $0xc] sm:$0xf]
    %v53 = vld [vmem:[#allocation5 + $0x10] sm:$0xf]
    %v54 = vld [vmem:[#allocation5 + $0x14] sm:$0xf]
    %v55 = vld [vmem:[#allocation5 + $0x18] sm:$0xf]
    %v56 = vld [vmem:[#allocation5 + $0x1c] sm:$0xf]
    %v57 = vld [vmem:[#allocation5 + $0x20] sm:$0xf]
    %v58 = vld [vmem:[#allocation5 + $0x24] sm:$0xf]
    %v59 = vld [vmem:[#allocation5 + $0x28] sm:$0xf]
    %v60 = vld [vmem:[#allocation5 + $0x2c] sm:$0xf]
    %v61 = vld [vmem:[#allocation5 + $0x30] sm:$0xf]
    %v62 = vld [vmem:[#allocation5 + $0x34] sm:$0xf]
    %v63 = vld [vmem:[#allocation5 + $0x38] sm:$0xf]
    %v64 = vld [vmem:[#allocation5 + $0x3c] sm:$0xf]
    %v65 = vld [vmem:[%s2] sm:$0x1]
    %v66 = vpack.c.bf16 %v48, %v47
    %v83 = vunpack.c.l.b16 %v49
    %v84 = vunpack.c.l.b16 %v50
    %v85 = vunpack.c.l.b16 %v51
    %v86 = vunpack.c.l.b16 %v52
    %v87 = vunpack.c.l.b16 %v53
    %v88 = vunpack.c.l.b16 %v54
    %v89 = vunpack.c.l.b16 %v55
    %v90 = vunpack.c.l.b16 %v56
    %v91 = vunpack.c.l.b16 %v57
    %v92 = vunpack.c.l.b16 %v58
    %v93 = vunpack.c.l.b16 %v59
    %v94 = vunpack.c.l.b16 %v60
    %v95 = vunpack.c.l.b16 %v61
    %v96 = vunpack.c.l.b16 %v62
    %v97 = vunpack.c.l.b16 %v63
    %v98 = vunpack.c.l.b16 %v64
    %v99 = vpack.c.b16 %v84, %v83
    %v100 = vpack.c.b16 %v86, %v85
    %v101 = vpack.c.b16 %v88, %v87
    %v102 = vpack.c.b16 %v90, %v89
    %v103 = vpack.c.b16 %v92, %v91
    %v104 = vpack.c.b16 %v94, %v93
    %v105 = vpack.c.b16 %v96, %v95
    %v106 = vpack.c.b16 %v98, %v97
    %115 = vmatprep.subr.bf16.mxu0 0
    %116 = vmatpush1.bf16.xpose.msra.mxu0 %v99
    %117 = vmatprep.subr.bf16.mxu0 0
    %118 = vmatpush1.bf16.xpose.msra.mxu0 %v100
    %119 = vmatprep.subr.bf16.mxu0 0
    %120 = vmatpush1.bf16.xpose.msra.mxu0 %v101
    %121 = vmatprep.subr.bf16.mxu0 0
    %122 = vmatpush1.bf16.xpose.msra.mxu0 %v102
    %123 = vmatprep.subr.bf16.mxu0 0
    %124 = vmatpush1.bf16.xpose.msra.mxu0 %v103
    %125 = vmatprep.subr.bf16.mxu0 0
    %126 = vmatpush1.bf16.xpose.msra.mxu0 %v104
    %127 = vmatprep.subr.bf16.mxu0 0
    %128 = vmatpush1.bf16.xpose.msra.mxu0 %v105
    %129 = vmatprep.subr.bf16.mxu0 0
    %130 = vmatpush1.bf16.xpose.msra.mxu0 %v106
    %131 = vmatprep.subr.bf16.mxu0 0
    %132 = vmatpush1.bf16.xpose.msra.mxu0 0
    %133 = vmatprep.subr.bf16.mxu0 0
    %134 = vmatpush1.bf16.xpose.msra.mxu0 0
    %135 = vmatprep.subr.bf16.mxu0 0
    %136 = vmatpush1.bf16.xpose.msra.mxu0 0
    %137 = vmatprep.subr.bf16.mxu0 0
    %138 = vmatpush1.bf16.xpose.msra.mxu0 0
    %139 = vmatprep.subr.bf16.mxu0 0
    %140 = vmatpush1.bf16.xpose.msra.mxu0 0
    %141 = vmatprep.subr.bf16.mxu0 0
    %142 = vmatpush1.bf16.xpose.msra.mxu0 0
    %143 = vmatprep.subr.bf16.mxu0 0
    %144 = vmatpush1.bf16.xpose.msra.mxu0 0
    %145 = vmatprep.subr.bf16.mxu0 0
    %146 = vmatpush1.bf16.xpose.msra.mxu0 0
    %147 = vmatprep.mubr.bf16.mxu0 0
    %148 = vmatmul.mubr.bf16.gmra.mrb[0].mxu0 %v66
    %v149 = vpop.f32.mrb[0].mxu0
    %v150 = vadd.f32 0.0, %v149
    %v151 = vpop.f32.mrb[0].mxu0
    %v152 = vpop.f32.mrb[0].mxu0
    %v153 = vadd.f32 0.0, %v152
    %v154 = vpop.f32.mrb[0].mxu0
    %155 = vdwg.mxu0
    %v156 = vmul.f32 %v150, 2.0
    %v157 = vmul.f32 %v153, 2.0
    %v158 = vlaneseq
    %v159 = vshrl.u32 %v158, 7
    %v160 = vsub.s32 0, %v159
    %v161 = vrot.slane %v65, %v160
    %v162 = vsub.f32 %v161, %v156
    %v163 = vsub.f32 %v161, %v157
    %164 = vmin.xlane.f32.xlu0 %v162
    %v165 = vpop.xlane.xlu0 %164
    %166 = vmin.xlane.f32.xlu0 %v163
    %v167 = vpop.xlane.xlu0 %166
    %v168 = vsub.f32 %v165, %v162
    %v169 = vsub.f32 %v167, %v163
    %v170 = vmul.f32 %v168, 1.442695
    %v171 = vpow.pop %v170
    %v172 = vmul.f32 %v169, 1.442695
    %v173 = vpow.pop %v172
    %174 = vadd.xlane.f32.xlu0 %v171
    %v175 = vpop.xlane.xlu0 %174
    %176 = vadd.xlane.f32.xlu0 %v173
    %v177 = vpop.xlane.xlu0 %176
    %v178 = vrcp.pop %v175
    %v179 = vmul.f32 %v171, %v178
    %v180 = vrcp.pop %v177
    %v181 = vmul.f32 %v173, %v180
    %182 = vmin.index.xlane.f32.xlu0 %v162
    %v183 = vpop.xlane.xlu0 %182
    %184 = vmin.index.xlane.f32.xlu0 %v163
    %v185 = vpop.xlane.xlu0 %184
    %v186 = vlaneseq
    %v187 = vand.u32 %v186, 127
    %vm188 = vcmp.eq.s32.totalorder %v187, %v183
    %vm189 = vcmp.eq.s32.totalorder %v187, %v185
    %v190 = vsel %vm188, 1, 0
    %v191 = vsel %vm189, 1, 0
    %v192 = vcvt.s32.f32 %v190
    %v193 = vcvt.s32.f32 %v191
    %v194 = vpack.c.bf16 %v193, %v192
    %195 = vmatprep.subr.bf16.mxu0 0
    %196 = vmatpush1.bf16.msra.mxu0 %v99
    %197 = vmatprep.subr.bf16.mxu0 0
    %198 = vmatpush1.bf16.msra.mxu0 %v100
    %199 = vmatprep.subr.bf16.mxu0 0
    %200 = vmatpush1.bf16.msra.mxu0 %v101
    %201 = vmatprep.subr.bf16.mxu0 0
    %202 = vmatpush1.bf16.msra.mxu0 %v102
    %203 = vmatprep.subr.bf16.mxu0 0
    %204 = vmatpush1.bf16.msra.mxu0 %v103
    %205 = vmatprep.subr.bf16.mxu0 0
    %206 = vmatpush1.bf16.msra.mxu0 %v104
    %207 = vmatprep.subr.bf16.mxu0 0
    %208 = vmatpush1.bf16.msra.mxu0 %v105
    %209 = vmatprep.subr.bf16.mxu0 0
    %210 = vmatpush1.bf16.msra.mxu0 %v106
    %211 = vmatprep.subr.bf16.mxu0 0
    %212 = vmatpush1.bf16.msra.mxu0 0
    %213 = vmatprep.subr.bf16.mxu0 0
    %214 = vmatpush1.bf16.msra.mxu0 0
    %215 = vmatprep.subr.bf16.mxu0 0
    %216 = vmatpush1.bf16.msra.mxu0 0
    %217 = vmatprep.subr.bf16.mxu0 0
    %218 = vmatpush1.bf16.msra.mxu0 0
    %219 = vmatprep.subr.bf16.mxu0 0
    %220 = vmatpush1.bf16.msra.mxu0 0
    %221 = vmatprep.subr.bf16.mxu0 0
    %222 = vmatpush1.bf16.msra.mxu0 0
    %223 = vmatprep.subr.bf16.mxu0 0
    %224 = vmatpush1.bf16.msra.mxu0 0
    %225 = vmatprep.subr.bf16.mxu0 0
    %226 = vmatpush1.bf16.msra.mxu0 0
    %227 = vmatprep.mubr.bf16.mxu0 0
    %228 = vmatmul.mubr.bf16.gmra.mrb[0].mxu0 %v194
    %v229 = vpop.f32.mrb[0].mxu0
    %v230 = vadd.f32 0.0, %v229
    %v231 = vpop.f32.mrb[0].mxu0
    %v232 = vpop.f32.mrb[0].mxu0
    %v233 = vadd.f32 0.0, %v232
    %v234 = vpop.f32.mrb[0].mxu0
    %235 = vdwg.mxu0
    %v236 = vsub.f32 %v47, %v230
    %v237 = vsub.f32 %v48, %v233
    %v238 = vmul.f32 %v236, %v236
    %v239 = vmul.f32 %v237, %v237
    %240 = vadd.xlane.f32.xlu0 %v238
    %v241 = vpop.xlane.xlu0 %240
    %242 = vadd.xlane.f32.xlu0 %v239
    %v243 = vpop.xlane.xlu0 %242
    %v244 = vadd.f32 %v241, 0.0
    %v245 = vadd.f32 %v243, 0.0
    %s246 = scalar_lea.vmem [#allocation5], 64
    %v247 = vld [vmem:[%s246] sm:$0xf]
    %v248 = vld [vmem:[%s246 + $0x4] sm:$0xf]
    %v249 = vld [vmem:[%s246 + $0x8] sm:$0xf]
    %v250 = vld [vmem:[%s246 + $0xc] sm:$0xf]
    %v251 = vld [vmem:[%s246 + $0x10] sm:$0xf]
    %v252 = vld [vmem:[%s246 + $0x14] sm:$0xf]
    %v253 = vld [vmem:[%s246 + $0x18] sm:$0xf]
    %v254 = vld [vmem:[%s246 + $0x1c] sm:$0xf]
    %v255 = vld [vmem:[%s246 + $0x20] sm:$0xf]
    %v256 = vld [vmem:[%s246 + $0x24] sm:$0xf]
    %v257 = vld [vmem:[%s246 + $0x28] sm:$0xf]
    %v258 = vld [vmem:[%s246 + $0x2c] sm:$0xf]
    %v259 = vld [vmem:[%s246 + $0x30] sm:$0xf]
    %v260 = vld [vmem:[%s246 + $0x34] sm:$0xf]
    %v261 = vld [vmem:[%s246 + $0x38] sm:$0xf]
    %v262 = vld [vmem:[%s246 + $0x3c] sm:$0xf]
    %v263 = vld [vmem:[%s2 + $0x1] sm:$0x1]
    %v264 = vpack.c.bf16 %v237, %v236
    %v281 = vunpack.c.l.b16 %v247
    %v282 = vunpack.c.l.b16 %v248
    %v283 = vunpack.c.l.b16 %v249
    %v284 = vunpack.c.l.b16 %v250
    %v285 = vunpack.c.l.b16 %v251
    %v286 = vunpack.c.l.b16 %v252
    %v287 = vunpack.c.l.b16 %v253
    %v288 = vunpack.c.l.b16 %v254
    %v289 = vunpack.c.l.b16 %v255
    %v290 = vunpack.c.l.b16 %v256
    %v291 = vunpack.c.l.b16 %v257
    %v292 = vunpack.c.l.b16 %v258
    %v293 = vunpack.c.l.b16 %v259
    %v294 = vunpack.c.l.b16 %v260
    %v295 = vunpack.c.l.b16 %v261
    %v296 = vunpack.c.l.b16 %v262
    %v297 = vpack.c.b16 %v282, %v281
    %v298 = vpack.c.b16 %v284, %v283
    %v299 = vpack.c.b16 %v286, %v285
    %v300 = vpack.c.b16 %v288, %v287
    %v301 = vpack.c.b16 %v290, %v289
    %v302 = vpack.c.b16 %v292, %v291
    %v303 = vpack.c.b16 %v294, %v293
    %v304 = vpack.c.b16 %v296, %v295
    %313 = vmatprep.subr.bf16.mxu0 0
    %314 = vmatpush1.bf16.xpose.msra.mxu0 %v297
    %315 = vmatprep.subr.bf16.mxu0 0
    %316 = vmatpush1.bf16.xpose.msra.mxu0 %v298
    %317 = vmatprep.subr.bf16.mxu0 0
    %318 = vmatpush1.bf16.xpose.msra.mxu0 %v299
    %319 = vmatprep.subr.bf16.mxu0 0
    %320 = vmatpush1.bf16.xpose.msra.mxu0 %v300
    %321 = vmatprep.subr.bf16.mxu0 0
    %322 = vmatpush1.bf16.xpose.msra.mxu0 %v301
    %323 = vmatprep.subr.bf16.mxu0 0
    %324 = vmatpush1.bf16.xpose.msra.mxu0 %v302
    %325 = vmatprep.subr.bf16.mxu0 0
    %326 = vmatpush1.bf16.xpose.msra.mxu0 %v303
    %327 = vmatprep.subr.bf16.mxu0 0
    %328 = vmatpush1.bf16.xpose.msra.mxu0 %v304
    %329 = vmatprep.subr.bf16.mxu0 0
    %330 = vmatpush1.bf16.xpose.msra.mxu0 0
    %331 = vmatprep.subr.bf16.mxu0 0
    %332 = vmatpush1.bf16.xpose.msra.mxu0 0
    %333 = vmatprep.subr.bf16.mxu0 0
    %334 = vmatpush1.bf16.xpose.msra.mxu0 0
    %335 = vmatprep.subr.bf16.mxu0 0
    %336 = vmatpush1.bf16.xpose.msra.mxu0 0
    %337 = vmatprep.subr.bf16.mxu0 0
    %338 = vmatpush1.bf16.xpose.msra.mxu0 0
    %339 = vmatprep.subr.bf16.mxu0 0
    %340 = vmatpush1.bf16.xpose.msra.mxu0 0
    %341 = vmatprep.subr.bf16.mxu0 0
    %342 = vmatpush1.bf16.xpose.msra.mxu0 0
    %343 = vmatprep.subr.bf16.mxu0 0
    %344 = vmatpush1.bf16.xpose.msra.mxu0 0
    %345 = vmatprep.mubr.bf16.mxu0 0
    %346 = vmatmul.mubr.bf16.gmra.mrb[0].mxu0 %v264
    %v347 = vpop.f32.mrb[0].mxu0
    %v348 = vadd.f32 0.0, %v347
    %v349 = vpop.f32.mrb[0].mxu0
    %v350 = vpop.f32.mrb[0].mxu0
    %v351 = vadd.f32 0.0, %v350
    %v352 = vpop.f32.mrb[0].mxu0
    %353 = vdwg.mxu0
    %v354 = vmul.f32 %v348, 2.0
    %v355 = vmul.f32 %v351, 2.0
    %v356 = vlaneseq
    %v357 = vshrl.u32 %v356, 7
    %v358 = vsub.s32 0, %v357
    %v359 = vrot.slane %v263, %v358
    %v360 = vsub.f32 %v359, %v354
    %v361 = vsub.f32 %v359, %v355
    %362 = vmin.xlane.f32.xlu0 %v360
    %v363 = vpop.xlane.xlu0 %362
    %364 = vmin.xlane.f32.xlu0 %v361
    %v365 = vpop.xlane.xlu0 %364
    %v366 = vadd.f32 %v363, %v241
    %v367 = vadd.f32 %v365, %v243
    %v368 = vmax.f32 %v366, 0.0
    %v369 = vmax.f32 %v367, 0.0
    %v370 = vadd.f32 %v244, %v368
    %v371 = vadd.f32 %v245, %v369
    %372 = vst [vmem:[#allocation7] sm:$0xff] %v179
    %373 = vst [vmem:[#allocation7 + $0x8] sm:$0xff] %v181
    %vm374 = vcmask 7168
    %v375 = vsel %vm374, %v370, 0.0
    %v376 = vsel %vm374, %v371, 0.0
    %v377 = vadd.f32 %v375, %v376
    %378 = vadd.xlane.f32.xlu0 %v377
    %v379 = vpop.xlane.xlu0 %378
    %v380 = vrot.slane %v379, 4
    %v381 = vadd.f32 %v379, %v380
    %v382 = vrot.slane %v381, 2
    %v383 = vadd.f32 %v381, %v382
    %v384 = vrot.slane %v383, 1
    %v385 = vadd.f32 %v383, %v384
    %s386 = vtos %v385
    %s387 = sadd.f32 %s386, 0.0
    %v388 = vstv %s387
    %389 = vst [vmem:[#allocation8] sm:$0xff] %v388
    // Predicated region
    $region22: #{tpu_custom_call.1} parent=1 // pred_check
      _
    $region23: #{tpu_custom_call.1} parent=1 // pred_check_branch
      %391 = sbr.rel (0) target = $region25
    $region24: #{tpu_custom_call.1} parent=1 // pred_region
      %s393 = ssub.s32 256, 256
      %394 = vsyncadd [#allocation4], %s393
      %s395 = sshll.u32 [#allocation7], 4
      %s396 = int_to_ptr.vmem [resolvable:$true] %s395
      %401 = dma.vmem_to_hbm [thread:$0]  %s396, 256, %s3, [#allocation4], 128, 128, 8
    $region25: #{tpu_custom_call.1} parent=1 // pred_fallthru
      _
    // Predicated region
    $region26: #{tpu_custom_call.1} parent=1 // pred_check
      _
    $region27: #{tpu_custom_call.1} parent=1 // pred_check_branch
      %403 = sbr.rel (0) target = $region29
    $region28: #{tpu_custom_call.1} parent=1 // pred_region
      %s405 = ssub.s32 128, 128
      %406 = vsyncadd [#allocation9], %s405
      %s408 = sshll.u32 [#allocation8], 4
      %s409 = int_to_ptr.vmem [resolvable:$true] %s408
      %411 = dma.vmem_to_hbm [thread:$0]  %s409, 128, %s4, [#allocation9]
    $region29: #{tpu_custom_call.1} parent=1 // pred_fallthru
      _
    // Predicated region
    $region30: #{tpu_custom_call.1} parent=1 // pred_check
      _
    $region31: #{tpu_custom_call.1} parent=1 // pred_check_branch
      %413 = sbr.rel (0) target = $region33
    $region32: #{tpu_custom_call.1} parent=1 // pred_region
      %414 = dma.done [#allocation4], 256
    $region33: #{tpu_custom_call.1} parent=1 // pred_fallthru
      _
    // Predicated region
    $region34: #{tpu_custom_call.1} parent=1 // pred_check
      _
    $region35: #{tpu_custom_call.1} parent=1 // pred_check_branch
      %416 = sbr.rel (0) target = $region37
    $region36: #{tpu_custom_call.1} parent=1 // pred_region
      %417 = dma.done [#allocation9], 128
    $region37: #{tpu_custom_call.1} parent=1 // pred_fallthru
      _
    %418 = vsyncpa [#allocation3], 1
    %419 = vsyncpa [#allocation6], 1
    %420 = vsyncpa [#allocation4], 1
    %421 = vsyncpa [#allocation9], 1

</llo_original>
